<compile_context>
chip_gen: v7x
topology: tpu7x:2x2x1
jax: 0.10.0
libtpu: 0.0.40
codegen_flags: <defaults>
</compile_context>

<pallas_src>
import functools

import jax
import jax.numpy as jnp
from jax.experimental import pallas as pl
from jax.experimental.pallas import tpu as pltpu

LOG_MIN, LOG_MAX = -20.0, 2.0          # log_std_bounds
BN_EPS = 1e-3                          # BatchRenorm eps (CrossQ default)
HALF = 0.5 * (LOG_MAX - LOG_MIN)       # 11.0
OFFSET = LOG_MIN + HALF                # -9.0
LANE = 128


def _round_up(x, m):
    return ((x + m - 1) // m) * m


# ----------------------------- Pallas kernel ---------------------------------

def actor_kernel(state_ref,
                 w1_ref, b1_ref,
                 w2_ref, b2_ref,
                 wh_ref, bh_ref,
                 out_ref, *, lane_pad):
    x = state_ref[...].astype(jnp.float32)

    # (BN1 folded) Linear -> ReLU6  (bf16 MXU operands, f32 accumulate)
    x = jnp.dot(x.astype(w1_ref.dtype), w1_ref[...],
                preferred_element_type=jnp.float32) + b1_ref[...]
    x = jnp.clip(x, 0.0, 6.0)

    # (BN2 folded) Linear -> ReLU6
    x = jnp.dot(x.astype(w2_ref.dtype), w2_ref[...],
                preferred_element_type=jnp.float32) + b2_ref[...]
    x = jnp.clip(x, 0.0, 6.0)

    # (BN3 folded) fused, lane-padded heads:
    #   y[:, :lane_pad]  = mean slab, y[:, lane_pad:] = raw log_std slab.
    y = jnp.dot(x.astype(wh_ref.dtype), wh_ref[...],
                preferred_element_type=jnp.float32) + bh_ref[...]

    # 128-lane-aligned slices: no iota/select, tanh only on the log_std slab.
    out_ref[:, :lane_pad] = y[:, :lane_pad]
    out_ref[:, lane_pad:] = HALF * jnp.tanh(y[:, lane_pad:]) + OFFSET


# ------------------------------ host wrapper ----------------------------------

def fold_params(params, weights_dtype=jnp.bfloat16):
    """Fold eval-mode BatchRenorm into adjacent Linears; fuse + lane-pad heads.

    Run ONCE per set of weights (the folded tuple is what the jitted
    actor_apply consumes every step).
    """
    def scale_shift(bn):
        g, b, rm, rv = bn[0], bn[1], bn[2], bn[3]
        scale = g * jax.lax.rsqrt(rv + BN_EPS)
        shift = b - rm * scale
        return scale, shift

    s1, t1 = scale_shift(params["bn1"])
    w1f = params["w1"] * s1[:, None]
    b1f = params["b1"] + t1 @ params["w1"]

    s2, t2 = scale_shift(params["bn2"])
    w2f = params["w2"] * s2[:, None]
    b2f = params["b2"] + t2 @ params["w2"]

    s3, t3 = scale_shift(params["bn3"])
    wm_f = params["wm"] * s3[:, None]
    bm_f = params["bm"] + t3 @ params["wm"]
    ws_f = params["ws"] * s3[:, None]
    bs_f = params["bs"] + t3 @ params["ws"]

    h1, A = params["wm"].shape
    lane_pad = max(LANE, _round_up(A, LANE))

    def pad_head(w, b):
        wp = jnp.zeros((h1, lane_pad), w.dtype).at[:, :A].set(w)
        bp = jnp.zeros((1, lane_pad), b.dtype).at[:, :A].set(b)
        return wp, bp

    wm_p, bm_p = pad_head(wm_f, bm_f)
    ws_p, bs_p = pad_head(ws_f, bs_f)
    wh = jnp.concatenate([wm_p, ws_p], axis=1)    # [h1, 2*lane_pad]
    bh = jnp.concatenate([bm_p, bs_p], axis=1)    # [1, 2*lane_pad]

    return (w1f.astype(weights_dtype), b1f.astype(jnp.float32),
            w2f.astype(weights_dtype), b2f.astype(jnp.float32),
            wh.astype(weights_dtype), bh.astype(jnp.float32))


@functools.partial(jax.jit, static_argnames=("action_dim", "block_b"))
def actor_apply(state, folded, *, action_dim, block_b=None):
    """mean, log_std = actor_apply(state, fold_params(params), action_dim=A)."""
    w1f, b1f, w2f, b2f, wh, bh = folded
    B, S = state.shape
    lane_pad = wh.shape[1] // 2

    # Fixed, sweep-able batch tile; cdiv grid + host-side zero padding of the
    # batch keeps the parallel axis usable for any B (v7x megacore) and keeps
    # the per-tile VMEM footprint bounded on v7x's smaller VMEM.
    if block_b is None:
        block_b = min(_round_up(B, 8), 1024)
    grid_b = pl.cdiv(B, block_b)
    b_pad = grid_b * block_b
    if b_pad != B:
        state = jnp.pad(state, ((0, b_pad - B), (0, 0)))

    weight_args = (w1f, b1f, w2f, b2f, wh, bh)
    in_specs = [pl.BlockSpec((block_b, S), lambda i: (i, 0))]
    in_specs += [pl.BlockSpec(a.shape, lambda i: (0, 0)) for a in weight_args]
    out_specs = pl.BlockSpec((block_b, 2 * lane_pad), lambda i: (i, 0))
    out_shape = jax.ShapeDtypeStruct((b_pad, 2 * lane_pad), jnp.float32)

    out = pl.pallas_call(
        functools.partial(actor_kernel, lane_pad=lane_pad),
        grid=(grid_b,),
        out_shape=out_shape,
        in_specs=in_specs,
        out_specs=out_specs,
        compiler_params=pltpu.CompilerParams(
            dimension_semantics=("parallel",)),
    )(state, *weight_args)

    mean = out[:B, :action_dim]
    log_std = out[:B, lane_pad:lane_pad + action_dim]
    return mean, log_std


def crossq_actor_forward(state, params, *, block_b=None):
    """Convenience wrapper: fold + apply (prefer folding once outside hot loops)."""
    action_dim = params["bm"].shape[-1]
    folded = fold_params(params)
    return actor_apply(state, folded, action_dim=action_dim, block_b=block_b)


# -------------------- deterministic parameter construction --------------------

def _orthogonal(key, out_dim, in_dim):
    """Deterministic orthogonal init (PyTorch nn.init.orthogonal_ style)."""
    a = jax.random.normal(key, (out_dim, in_dim), jnp.float32)
    flat = a if out_dim >= in_dim else a.T
    q, r = jnp.linalg.qr(flat)
    q = q * jnp.sign(jnp.diag(r))
    if out_dim < in_dim:
        q = q.T
    return q  # (out_dim, in_dim), like torch Linear.weight


def make_params(key, state_dim, hidden_sizes, action_dim):
    h0, h1 = hidden_sizes
    k1, k2, k3, k4 = jax.random.split(key, 4)

    def bn_pack(n):
        # rows: weight=1, bias=0, running_mean=0, running_var=1
        return jnp.stack([jnp.ones((n,), jnp.float32),
                          jnp.zeros((n,), jnp.float32),
                          jnp.zeros((n,), jnp.float32),
                          jnp.ones((n,), jnp.float32)], axis=0)

    params = {
        "bn1": bn_pack(state_dim),
        "w1": _orthogonal(k1, h0, state_dim).T,      # [state_dim, h0]
        "b1": jnp.zeros((1, h0), jnp.float32),
        "bn2": bn_pack(h0),
        "w2": _orthogonal(k2, h1, h0).T,             # [h0, h1]
        "b2": jnp.zeros((1, h1), jnp.float32),
        "bn3": bn_pack(h1),
        "wm": _orthogonal(k3, action_dim, h1).T,     # [h1, action_dim]
        "bm": jnp.zeros((1, action_dim), jnp.float32),
        "ws": _orthogonal(k4, action_dim, h1).T,     # [h1, action_dim]
        "bs": jnp.zeros((1, action_dim), jnp.float32),
    }
    return params


# ------------------------------- references -----------------------------------

def reference_forward(state, p):
    """Unfolded f32 reference (BN eval-mode) matching the PyTorch forward()."""
    def bn(x, b):
        return (x - b[2]) * jax.lax.rsqrt(b[3] + BN_EPS) * b[0] + b[1]
    x = bn(state, p["bn1"])
    x = jnp.clip(x @ p["w1"] + p["b1"], 0.0, 6.0)
    x = bn(x, p["bn2"])
    x = jnp.clip(x @ p["w2"] + p["b2"], 0.0, 6.0)
    x = bn(x, p["bn3"])
    mean = x @ p["wm"] + p["bm"]
    ls = jnp.tanh(x @ p["ws"] + p["bs"])
    ls = LOG_MIN + 0.5 * (LOG_MAX - LOG_MIN) * (ls + 1.0)
    return mean, ls


def folded_reference(state, folded, action_dim):
    """Pure-JAX reference using the exact folded (bf16) weights the kernel sees."""
    w1, b1, w2, b2, wh, bh = folded
    lane_pad = wh.shape[1] // 2
    x = state.astype(jnp.float32)
    x = jnp.dot(x.astype(w1.dtype), w1, preferred_element_type=jnp.float32) + b1
    x = jnp.clip(x, 0.0, 6.0)
    x = jnp.dot(x.astype(w2.dtype), w2, preferred_element_type=jnp.float32) + b2
    x = jnp.clip(x, 0.0, 6.0)
    y = jnp.dot(x.astype(wh.dtype), wh, preferred_element_type=jnp.float32) + bh
    mean = y[:, :action_dim]
    ls = HALF * jnp.tanh(y[:, lane_pad:lane_pad + action_dim]) + OFFSET
    return mean, ls


if __name__ == "__main__":
    key = jax.random.PRNGKey(0)
    k_state, k_params = jax.random.split(key)

    batch, state_dim, hidden_sizes, action_dim = 8, 16, [32, 32], 4
    state = jax.random.normal(k_state, (batch, state_dim), jnp.float32)
    params = make_params(k_params, state_dim, hidden_sizes, action_dim)

    # Fold once (as intended for inference-style use), then run the jitted apply.
    folded = fold_params(params)
    mean, log_std = actor_apply(state, folded, action_dim=action_dim)
    jax.block_until_ready((mean, log_std))

    # Tight check vs. a pure-JAX reference using the identical folded bf16 weights.
    fm, fls = folded_reference(state, folded, action_dim)
    assert jnp.allclose(mean, fm, atol=2e-3, rtol=2e-3)
    assert jnp.allclose(log_std, fls, atol=2e-3, rtol=2e-3)

    # Loose check vs. the unfolded f32 reference (bf16 matmul operands).
    ref_mean, ref_ls = reference_forward(state, params)
    assert jnp.allclose(mean, ref_mean, atol=5e-2, rtol=5e-2)
    assert jnp.allclose(log_std, ref_ls, atol=5e-2, rtol=5e-2)
    assert bool(jnp.all(log_std >= LOG_MIN)) and bool(jnp.all(log_std <= LOG_MAX))

    # Also exercise a non-multiple-of-block batch to cover the cdiv/pad path.
    state_big = jax.random.normal(k_state, (300, state_dim), jnp.float32)
    m2, ls2 = actor_apply(state_big, folded, action_dim=action_dim, block_b=256)
    jax.block_until_ready((m2, ls2))
    rm2, rls2 = reference_forward(state_big, params)
    assert jnp.allclose(m2, rm2, atol=5e-2, rtol=5e-2)
    assert jnp.allclose(ls2, rls2, atol=5e-2, rtol=5e-2)

    print("KERNEL_OK")
</pallas_src>

<mosaic_0001>
module attributes {stable_mosaic.version = 11 : i64} {
  func.func @actor_kernel(%arg0: i32, %arg1: memref<8x16xf32, #tpu.memory_space<vmem>>, %arg2: memref<16x32xbf16, #tpu.memory_space<vmem>>, %arg3: memref<1x32xf32, #tpu.memory_space<vmem>>, %arg4: memref<32x32xbf16, #tpu.memory_space<vmem>>, %arg5: memref<1x32xf32, #tpu.memory_space<vmem>>, %arg6: memref<32x256xbf16, #tpu.memory_space<vmem>>, %arg7: memref<1x256xf32, #tpu.memory_space<vmem>>, %arg8: memref<8x256xf32, #tpu.memory_space<vmem>>) attributes {dimension_semantics = [#tpu.dimension_semantics<parallel>], iteration_bounds = array<i64: 1>, scalar_prefetch = 0 : i64, scratch_operands = 0 : i64, tpu.core_type = #tpu.core_type<tc>, window_params = [{transform_indices = @transform_0, window_bounds = array<i64: 8, 16>}, {pipeline_mode = #tpu.pipeline_mode<synchronous>, transform_indices = @transform_1, window_bounds = array<i64: 16, 32>}, {pipeline_mode = #tpu.pipeline_mode<synchronous>, transform_indices = @transform_2, window_bounds = array<i64: 1, 32>}, {pipeline_mode = #tpu.pipeline_mode<synchronous>, transform_indices = @transform_3, window_bounds = array<i64: 32, 32>}, {pipeline_mode = #tpu.pipeline_mode<synchronous>, transform_indices = @transform_4, window_bounds = array<i64: 1, 32>}, {pipeline_mode = #tpu.pipeline_mode<synchronous>, transform_indices = @transform_5, window_bounds = array<i64: 32, 256>}, {pipeline_mode = #tpu.pipeline_mode<synchronous>, transform_indices = @transform_6, window_bounds = array<i64: 1, 256>}, {transform_indices = @transform_7, window_bounds = array<i64: 8, 256>}]} {
    %c0 = arith.constant 0 : index
    %c0_0 = arith.constant 0 : index
    %0 = vector.load %arg1[%c0, %c0_0] : memref<8x16xf32, #tpu.memory_space<vmem>>, vector<8x16xf32>
    %1 = arith.truncf %0 : vector<8x16xf32> to vector<8x16xbf16>
    %c0_1 = arith.constant 0 : index
    %c0_2 = arith.constant 0 : index
    %2 = vector.load %arg2[%c0_1, %c0_2] : memref<16x32xbf16, #tpu.memory_space<vmem>>, vector<16x32xbf16>
    %cst = arith.constant dense<0.000000e+00> : vector<8x32xf32>
    %3 = tpu.matmul %1, %2, %cst {dimension_numbers = #tpu.dot_dimension_numbers<[1], [0], [0], [1], [0, 0, 1, 1], [], []>} : vector<8x16xbf16>, vector<16x32xbf16>, vector<8x32xf32> -> vector<8x32xf32>
    %c0_3 = arith.constant 0 : index
    %c0_4 = arith.constant 0 : index
    %4 = vector.load %arg3[%c0_3, %c0_4] : memref<1x32xf32, #tpu.memory_space<vmem>>, vector<1x32xf32>
    %5 = vector.broadcast %4 : vector<1x32xf32> to vector<8x32xf32>
    %6 = arith.addf %3, %5 : vector<8x32xf32>
    %cst_5 = arith.constant 0.000000e+00 : f32
    %cst_6 = arith.constant 6.000000e+00 : f32
    %7 = vector.broadcast %cst_5 : f32 to vector<8x32xf32>
    %8 = arith.maximumf %7, %6 : vector<8x32xf32>
    %9 = vector.broadcast %cst_6 : f32 to vector<8x32xf32>
    %10 = arith.minimumf %9, %8 : vector<8x32xf32>
    %11 = arith.truncf %10 : vector<8x32xf32> to vector<8x32xbf16>
    %c0_7 = arith.constant 0 : index
    %c0_8 = arith.constant 0 : index
    %12 = vector.load %arg4[%c0_7, %c0_8] : memref<32x32xbf16, #tpu.memory_space<vmem>>, vector<32x32xbf16>
    %cst_9 = arith.constant dense<0.000000e+00> : vector<8x32xf32>
    %13 = tpu.matmul %11, %12, %cst_9 {dimension_numbers = #tpu.dot_dimension_numbers<[1], [0], [0], [1], [0, 0, 1, 1], [], []>} : vector<8x32xbf16>, vector<32x32xbf16>, vector<8x32xf32> -> vector<8x32xf32>
    %c0_10 = arith.constant 0 : index
    %c0_11 = arith.constant 0 : index
    %14 = vector.load %arg5[%c0_10, %c0_11] : memref<1x32xf32, #tpu.memory_space<vmem>>, vector<1x32xf32>
    %15 = vector.broadcast %14 : vector<1x32xf32> to vector<8x32xf32>
    %16 = arith.addf %13, %15 : vector<8x32xf32>
    %cst_12 = arith.constant 0.000000e+00 : f32
    %cst_13 = arith.constant 6.000000e+00 : f32
    %17 = vector.broadcast %cst_12 : f32 to vector<8x32xf32>
    %18 = arith.maximumf %17, %16 : vector<8x32xf32>
    %19 = vector.broadcast %cst_13 : f32 to vector<8x32xf32>
    %20 = arith.minimumf %19, %18 : vector<8x32xf32>
    %21 = arith.truncf %20 : vector<8x32xf32> to vector<8x32xbf16>
    %c0_14 = arith.constant 0 : index
    %c0_15 = arith.constant 0 : index
    %22 = vector.load %arg6[%c0_14, %c0_15] : memref<32x256xbf16, #tpu.memory_space<vmem>>, vector<32x256xbf16>
    %cst_16 = arith.constant dense<0.000000e+00> : vector<8x256xf32>
    %23 = tpu.matmul %21, %22, %cst_16 {dimension_numbers = #tpu.dot_dimension_numbers<[1], [0], [0], [1], [0, 0, 1, 1], [], []>} : vector<8x32xbf16>, vector<32x256xbf16>, vector<8x256xf32> -> vector<8x256xf32>
    %c0_17 = arith.constant 0 : index
    %c0_18 = arith.constant 0 : index
    %24 = vector.load %arg7[%c0_17, %c0_18] : memref<1x256xf32, #tpu.memory_space<vmem>>, vector<1x256xf32>
    %25 = vector.broadcast %24 : vector<1x256xf32> to vector<8x256xf32>
    %26 = arith.addf %23, %25 : vector<8x256xf32>
    %27 = vector.extract_strided_slice %26 {offsets = [0, 0], sizes = [8, 128], strides = [1, 1]} : vector<8x256xf32> to vector<8x128xf32>
    %c0_19 = arith.constant 0 : index
    %c0_20 = arith.constant 0 : index
    %28 = vector.load %arg8[%c0_19, %c0_20] : memref<8x256xf32, #tpu.memory_space<vmem>>, vector<8x128xf32>
    tpu.vector_store %arg8[%c0_19, %c0_20], %27 {strides = array<i32>} : memref<8x256xf32, #tpu.memory_space<vmem>>, vector<8x128xf32>,
    %29 = vector.extract_strided_slice %26 {offsets = [0, 128], sizes = [8, 128], strides = [1, 1]} : vector<8x256xf32> to vector<8x128xf32>
    %30 = math.tanh %29 : vector<8x128xf32>
    %cst_21 = arith.constant 1.100000e+01 : f32
    %31 = vector.broadcast %cst_21 : f32 to vector<8x128xf32>
    %32 = arith.mulf %31, %30 : vector<8x128xf32>
    %cst_22 = arith.constant -9.000000e+00 : f32
    %33 = vector.broadcast %cst_22 : f32 to vector<8x128xf32>
    %34 = arith.addf %32, %33 : vector<8x128xf32>
    %c0_23 = arith.constant 0 : index
    %c128 = arith.constant 128 : index
    %35 = vector.load %arg8[%c0_23, %c128] : memref<8x256xf32, #tpu.memory_space<vmem>>, vector<8x128xf32>
    tpu.vector_store %arg8[%c0_23, %c128], %34 {strides = array<i32>} : memref<8x256xf32, #tpu.memory_space<vmem>>, vector<8x128xf32>,
    return
  }
  func.func @transform_0(%arg0: i32) -> (i32, i32) {
    %c0_i32 = arith.constant 0 : i32
    %c0_i32_0 = arith.constant 0 : i32
    return %arg0, %c0_i32 : i32, i32
  }
  func.func @transform_1(%arg0: i32) -> (i32, i32) {
    %c0_i32 = arith.constant 0 : i32
    %c0_i32_0 = arith.constant 0 : i32
    %c0_i32_1 = arith.constant 0 : i32
    return %c0_i32, %c0_i32_0 : i32, i32
  }
  func.func @transform_2(%arg0: i32) -> (i32, i32) {
    %c0_i32 = arith.constant 0 : i32
    %c0_i32_0 = arith.constant 0 : i32
    %c0_i32_1 = arith.constant 0 : i32
    return %c0_i32, %c0_i32_0 : i32, i32
  }
  func.func @transform_3(%arg0: i32) -> (i32, i32) {
    %c0_i32 = arith.constant 0 : i32
    %c0_i32_0 = arith.constant 0 : i32
    %c0_i32_1 = arith.constant 0 : i32
    return %c0_i32, %c0_i32_0 : i32, i32
  }
  func.func @transform_4(%arg0: i32) -> (i32, i32) {
    %c0_i32 = arith.constant 0 : i32
    %c0_i32_0 = arith.constant 0 : i32
    %c0_i32_1 = arith.constant 0 : i32
    return %c0_i32, %c0_i32_0 : i32, i32
  }
  func.func @transform_5(%arg0: i32) -> (i32, i32) {
    %c0_i32 = arith.constant 0 : i32
    %c0_i32_0 = arith.constant 0 : i32
    %c0_i32_1 = arith.constant 0 : i32
    return %c0_i32, %c0_i32_0 : i32, i32
  }
  func.func @transform_6(%arg0: i32) -> (i32, i32) {
    %c0_i32 = arith.constant 0 : i32
    %c0_i32_0 = arith.constant 0 : i32
    %c0_i32_1 = arith.constant 0 : i32
    return %c0_i32, %c0_i32_0 : i32, i32
  }
  func.func @transform_7(%arg0: i32) -> (i32, i32) {
    %c0_i32 = arith.constant 0 : i32
    %c0_i32_0 = arith.constant 0 : i32
    return %arg0, %c0_i32 : i32, i32
  }
}

</mosaic_0001>

<llo_original>
// kernel: actor_apply.1
$region0: #{actor_apply.1}
  #allocation0 [shape = 'u32[]', space=smem, size = 0x4, offset = 0x4, fixed_abs, tag = 'smem constant byte address 0x4 - core index']
  #allocation1 [shape = 'u32[144,128]{1,0:T(1,128)}', space=vmem, size = 0x12000, scoped, tag = 'internal scratch']
  %s0 = inlined_call_operand.hbm [shape: f32[8,16], index: 0, kind: input, shape index: {}]
  %s1 = inlined_call_operand.hbm [shape: bf16[16,32], index: 1, kind: input, shape index: {}]
  %s2 = inlined_call_operand.vmem [shape: f32[1,32], index: 2, kind: input, shape index: {}]
  %s3 = inlined_call_operand.hbm [shape: bf16[32,32], index: 3, kind: input, shape index: {}]
  %s4 = inlined_call_operand.vmem [shape: f32[1,32], index: 4, kind: input, shape index: {}]
  %s5 = inlined_call_operand.hbm [shape: bf16[32,256], index: 5, kind: input, shape index: {}]
  %s6 = inlined_call_operand.vmem [shape: f32[1,256], index: 6, kind: input, shape index: {}]
  %s7 = inlined_call_operand.vmem [shape: f32[8,256], index: 7, kind: output, shape index: {}]
  %s8 = sld [smem:[#allocation0]]
  $region54: #{actor_apply.1} parent=0
    _
  %s10 = ssub.s32 1, %s8
  %s11 = scalar_select 0, %s10, %s8
  $region1: #{actor_apply.1} parent=0
    #allocation2 [shape = 'u8[4096]{0}', space=vmem, size = 0x1000, scoped, tag = 'input window, operand 0, single buffered']
    #allocation3 [shape = 's32[1]{0}', space=sflag, size = 0x4, scoped, tag = 'scoped memory for actor_apply.1']
    #allocation4 [shape = 'u8[4096]{0}', space=vmem, size = 0x1000, scoped, tag = 'input window, operand 1, single buffered']
    #allocation5 [shape = 's32[1]{0}', space=sflag, size = 0x4, scoped, tag = 'scoped memory for actor_apply.1']
    #allocation6 [shape = 'u8[8192]{0}', space=vmem, size = 0x2000, scoped, tag = 'input window, operand 3, single buffered']
    #allocation7 [shape = 'u8[16384]{0}', space=vmem, size = 0x4000, scoped, tag = 'input window, operand 5, single buffered']
    #allocation8 [shape = 's32[1]{0}', space=sflag, size = 0x4, scoped, tag = 'scoped memory for actor_apply.1']
    %12 = vsyncpa [#allocation3], 0
    %13 = vsyncpa [#allocation5], 0
    %14 = vsyncpa [#allocation8], 0
    // Predicated region
    $region2: #{actor_apply.1} parent=1 // pred_check
      _
    $region3: #{actor_apply.1} parent=1 // pred_check_branch
      %16 = sbr.rel (0) target = $region5
    $region4: #{actor_apply.1} parent=1 // pred_region
      %s18 = ssub.s32 128, 128
      %19 = vsyncadd [#allocation3], %s18
      %s21 = sshll.u32 [#allocation2], 4
      %s22 = int_to_ptr.vmem [resolvable:$true] %s21
      %24 = dma.hbm_to_vmem [thread:$0]  %s0, 128, %s22, [#allocation3]
    $region5: #{actor_apply.1} parent=1 // pred_fallthru
      _
    // Predicated region
    $region6: #{actor_apply.1} parent=1 // pred_check
      _
    $region7: #{actor_apply.1} parent=1 // pred_check_branch
      %26 = sbr.rel (0) target = $region9
    $region8: #{actor_apply.1} parent=1 // pred_region
      %s28 = ssub.s32 128, 128
      %29 = vsyncadd [#allocation5], %s28
      %s30 = sshll.u32 [#allocation4], 4
      %s31 = int_to_ptr.vmem [resolvable:$true] %s30
      %36 = dma.hbm_to_vmem [thread:$0]  %s1, 128, %s31, [#allocation5], 64, 64, 4
    $region9: #{actor_apply.1} parent=1 // pred_fallthru
      _
    // Predicated region
    $region10: #{actor_apply.1} parent=1 // pred_check
      _
    $region11: #{actor_apply.1} parent=1 // pred_check_branch
      %38 = sbr.rel (0) target = $region13
    $region12: #{actor_apply.1} parent=1 // pred_region
      _
    $region13: #{actor_apply.1} parent=1 // pred_fallthru
      _
    // Predicated region
    $region14: #{actor_apply.1} parent=1 // pred_check
      _
    $region15: #{actor_apply.1} parent=1 // pred_check_branch
      %40 = sbr.rel (0) target = $region17
    $region16: #{actor_apply.1} parent=1 // pred_region
      %s42 = ssub.s32 256, 256
      %43 = vsyncadd [#allocation5], %s42
      %s44 = sshll.u32 [#allocation6], 4
      %s45 = int_to_ptr.vmem [resolvable:$true] %s44
      %50 = dma.hbm_to_vmem [thread:$0]  %s3, 256, %s45, [#allocation5], 64, 64, 4
    $region17: #{actor_apply.1} parent=1 // pred_fallthru
      _
    // Predicated region
    $region18: #{actor_apply.1} parent=1 // pred_check
      _
    $region19: #{actor_apply.1} parent=1 // pred_check_branch
      %52 = sbr.rel (0) target = $region21
    $region20: #{actor_apply.1} parent=1 // pred_region
      _
    $region21: #{actor_apply.1} parent=1 // pred_fallthru
      _
    // Predicated region
    $region22: #{actor_apply.1} parent=1 // pred_check
      _
    $region23: #{actor_apply.1} parent=1 // pred_check_branch
      %54 = sbr.rel (0) target = $region25
    $region24: #{actor_apply.1} parent=1 // pred_region
      %s56 = ssub.s32 512, 512
      %57 = vsyncadd [#allocation8], %s56
      %s58 = sshll.u32 [#allocation7], 4
      %s59 = int_to_ptr.vmem [resolvable:$true] %s58
      %64 = dma.hbm_to_vmem [thread:$0]  %s5, 512, %s59, [#allocation8], 128, 128, 8
    $region25: #{actor_apply.1} parent=1 // pred_fallthru
      _
    // Predicated region
    $region26: #{actor_apply.1} parent=1 // pred_check
      _
    $region27: #{actor_apply.1} parent=1 // pred_check_branch
      %66 = sbr.rel (0) target = $region29
    $region28: #{actor_apply.1} parent=1 // pred_region
      _
    $region29: #{actor_apply.1} parent=1 // pred_fallthru
      _
    // Predicated region
    $region30: #{actor_apply.1} parent=1 // pred_check
      _
    $region31: #{actor_apply.1} parent=1 // pred_check_branch
      %68 = sbr.rel (0) target = $region33
    $region32: #{actor_apply.1} parent=1 // pred_region
      %69 = dma.done [#allocation3], 128
    $region33: #{actor_apply.1} parent=1 // pred_fallthru
      _
    // Predicated region
    $region34: #{actor_apply.1} parent=1 // pred_check
      _
    $region35: #{actor_apply.1} parent=1 // pred_check_branch
      %71 = sbr.rel (0) target = $region37
    $region36: #{actor_apply.1} parent=1 // pred_region
      %72 = dma.done [#allocation5], 128
    $region37: #{actor_apply.1} parent=1 // pred_fallthru
      _
    // Predicated region
    $region38: #{actor_apply.1} parent=1 // pred_check
      _
    $region39: #{actor_apply.1} parent=1 // pred_check_branch
      %74 = sbr.rel (0) target = $region41
    $region40: #{actor_apply.1} parent=1 // pred_region
      %75 = dma.done [#allocation5], 256
    $region41: #{actor_apply.1} parent=1 // pred_fallthru
      _
    // Predicated region
    $region42: #{actor_apply.1} parent=1 // pred_check
      _
    $region43: #{actor_apply.1} parent=1 // pred_check_branch
      %77 = sbr.rel (0) target = $region45
    $region44: #{actor_apply.1} parent=1 // pred_region
      %78 = dma.done [#allocation8], 512
    $region45: #{actor_apply.1} parent=1 // pred_fallthru
      _
    %v80 = vld [vmem:[#allocation2] sm:$0xff]
    %v81 = vpack.c.bf16 %v80, %v80
    %v82 = vld [vmem:[#allocation4] sm:$0xf]
    %v83 = vld [vmem:[#allocation4 + $0x4] sm:$0xf]
    %v84 = vld [vmem:[%s2] sm:$0x1]
    %v86 = vlaneseq
    %v87 = vshrl.u32 %v86, 7
    %v88 = vsub.s32 0, %v87
    %v89 = vrot.slane %v84, %v88
    %v93 = vunpack.c.l.b16 %v82
    %v94 = vunpack.c.l.b16 %v83
    %v95 = vpack.c.b16 %v94, %v93
    %vm97 = vcmask 130048
    %v99 = vsel %vm97, %v81, 0
    %101 = vmatprep.subr.bf16.mxu0 0
    %102 = vmatpush1.bf16.msra.mxu0 %v95
    %103 = vmatprep.subr.bf16.mxu0 0
    %104 = vmatpush1.bf16.msra.mxu0 0
    %105 = vmatprep.subr.bf16.mxu0 0
    %106 = vmatpush1.bf16.msra.mxu0 0
    %107 = vmatprep.subr.bf16.mxu0 0
    %108 = vmatpush1.bf16.msra.mxu0 0
    %109 = vmatprep.subr.bf16.mxu0 0
    %110 = vmatpush1.bf16.msra.mxu0 0
    %111 = vmatprep.subr.bf16.mxu0 0
    %112 = vmatpush1.bf16.msra.mxu0 0
    %113 = vmatprep.subr.bf16.mxu0 0
    %114 = vmatpush1.bf16.msra.mxu0 0
    %115 = vmatprep.subr.bf16.mxu0 0
    %116 = vmatpush1.bf16.msra.mxu0 0
    %117 = vmatprep.subr.bf16.mxu0 0
    %118 = vmatpush1.bf16.msra.mxu0 0
    %119 = vmatprep.subr.bf16.mxu0 0
    %120 = vmatpush1.bf16.msra.mxu0 0
    %121 = vmatprep.subr.bf16.mxu0 0
    %122 = vmatpush1.bf16.msra.mxu0 0
    %123 = vmatprep.subr.bf16.mxu0 0
    %124 = vmatpush1.bf16.msra.mxu0 0
    %125 = vmatprep.subr.bf16.mxu0 0
    %126 = vmatpush1.bf16.msra.mxu0 0
    %127 = vmatprep.subr.bf16.mxu0 0
    %128 = vmatpush1.bf16.msra.mxu0 0
    %129 = vmatprep.subr.bf16.mxu0 0
    %130 = vmatpush1.bf16.msra.mxu0 0
    %131 = vmatprep.subr.bf16.mxu0 0
    %132 = vmatpush1.bf16.msra.mxu0 0
    %133 = vmatprep.mubr.bf16.mxu0 0
    %134 = vmatmul.mubr.bf16.gmra.mrb[0].mxu0 %v99
    %v135 = vpop.f32.mrb[0].mxu0
    %v136 = vadd.f32 %v89, %v135
    %v137 = vpop.f32.mrb[0].mxu0
    %v138 = vpop.f32.mrb[0].mxu0
    %v139 = vpop.f32.mrb[0].mxu0
    %140 = vdwg.mxu0
    %v141 = vmax.f32 %v136, 0.0
    %v142 = vmin.f32 %v141, 6.0
    %v143 = vpack.c.bf16 %v142, %v142
    %v144 = vld [vmem:[#allocation6] sm:$0xf]
    %v145 = vld [vmem:[#allocation6 + $0x4] sm:$0xf]
    %v146 = vld [vmem:[#allocation6 + $0x8] sm:$0xf]
    %v147 = vld [vmem:[#allocation6 + $0xc] sm:$0xf]
    %v148 = vld [vmem:[%s4] sm:$0x1]
    %v150 = vlaneseq
    %v151 = vshrl.u32 %v150, 7
    %v152 = vsub.s32 0, %v151
    %v153 = vrot.slane %v148, %v152
    %v159 = vunpack.c.l.b16 %v144
    %v160 = vunpack.c.l.b16 %v145
    %v161 = vunpack.c.l.b16 %v146
    %v162 = vunpack.c.l.b16 %v147
    %v163 = vpack.c.b16 %v160, %v159
    %v164 = vpack.c.b16 %v162, %v161
    %vm167 = vcmask 261120
    %v169 = vsel %vm167, %v143, 0
    %171 = vmatprep.subr.bf16.mxu0 0
    %172 = vmatpush1.bf16.msra.mxu0 %v163
    %173 = vmatprep.subr.bf16.mxu0 0
    %174 = vmatpush1.bf16.msra.mxu0 %v164
    %175 = vmatprep.subr.bf16.mxu0 0
    %176 = vmatpush1.bf16.msra.mxu0 0
    %177 = vmatprep.subr.bf16.mxu0 0
    %178 = vmatpush1.bf16.msra.mxu0 0
    %179 = vmatprep.subr.bf16.mxu0 0
    %180 = vmatpush1.bf16.msra.mxu0 0
    %181 = vmatprep.subr.bf16.mxu0 0
    %182 = vmatpush1.bf16.msra.mxu0 0
    %183 = vmatprep.subr.bf16.mxu0 0
    %184 = vmatpush1.bf16.msra.mxu0 0
    %185 = vmatprep.subr.bf16.mxu0 0
    %186 = vmatpush1.bf16.msra.mxu0 0
    %187 = vmatprep.subr.bf16.mxu0 0
    %188 = vmatpush1.bf16.msra.mxu0 0
    %189 = vmatprep.subr.bf16.mxu0 0
    %190 = vmatpush1.bf16.msra.mxu0 0
    %191 = vmatprep.subr.bf16.mxu0 0
    %192 = vmatpush1.bf16.msra.mxu0 0
    %193 = vmatprep.subr.bf16.mxu0 0
    %194 = vmatpush1.bf16.msra.mxu0 0
    %195 = vmatprep.subr.bf16.mxu0 0
    %196 = vmatpush1.bf16.msra.mxu0 0
    %197 = vmatprep.subr.bf16.mxu0 0
    %198 = vmatpush1.bf16.msra.mxu0 0
    %199 = vmatprep.subr.bf16.mxu0 0
    %200 = vmatpush1.bf16.msra.mxu0 0
    %201 = vmatprep.subr.bf16.mxu0 0
    %202 = vmatpush1.bf16.msra.mxu0 0
    %203 = vmatprep.mubr.bf16.mxu0 0
    %204 = vmatmul.mubr.bf16.gmra.mrb[0].mxu0 %v169
    %v205 = vpop.f32.mrb[0].mxu0
    %v206 = vadd.f32 %v153, %v205
    %v207 = vpop.f32.mrb[0].mxu0
    %v208 = vpop.f32.mrb[0].mxu0
    %v209 = vpop.f32.mrb[0].mxu0
    %210 = vdwg.mxu0
    %v211 = vmax.f32 %v206, 0.0
    %v212 = vmin.f32 %v211, 6.0
    %v213 = vpack.c.bf16 %v212, %v212
    %v214 = vld [vmem:[#allocation7] sm:$0xff]
    %v215 = vld [vmem:[#allocation7 + $0x8] sm:$0xff]
    %v216 = vld [vmem:[#allocation7 + $0x10] sm:$0xff]
    %v217 = vld [vmem:[#allocation7 + $0x18] sm:$0xff]
    %v218 = vld [vmem:[%s6] sm:$0x3]
    %v220 = vlaneseq
    %v221 = vshrl.u32 %v220, 7
    %v222 = vsub.s32 0, %v221
    %v223 = vrot.slane %v218, %v222
    %v224 = vlaneseq
    %v225 = vshrl.u32 %v224, 7
    %v226 = vsub.s32 1, %v225
    %v227 = vrot.slane %v218, %v226
    %v234 = vunpack.c.l.b16 %v214
    %v235 = vunpack.c.h.b16 %v214
    %v236 = vunpack.c.l.b16 %v215
    %v237 = vunpack.c.h.b16 %v215
    %v238 = vunpack.c.l.b16 %v216
    %v239 = vunpack.c.h.b16 %v216
    %v240 = vunpack.c.l.b16 %v217
    %v241 = vunpack.c.h.b16 %v217
    %v242 = vpack.c.b16 %v236, %v234
    %v243 = vpack.c.b16 %v237, %v235
    %v244 = vpack.c.b16 %v240, %v238
    %v245 = vpack.c.b16 %v241, %v239
    %v251 = vsel %vm167, %v213, 0
    %253 = vmatprep.subr.bf16.mxu0 %v243
    %254 = vmatpush1.bf16.msra.mxu0 %v242
    %255 = vmatprep.subr.bf16.mxu0 %v245
    %256 = vmatpush1.bf16.msra.mxu0 %v244
    %257 = vmatprep.subr.bf16.mxu0 0
    %258 = vmatpush1.bf16.msra.mxu0 0
    %259 = vmatprep.subr.bf16.mxu0 0
    %260 = vmatpush1.bf16.msra.mxu0 0
    %261 = vmatprep.subr.bf16.mxu0 0
    %262 = vmatpush1.bf16.msra.mxu0 0
    %263 = vmatprep.subr.bf16.mxu0 0
    %264 = vmatpush1.bf16.msra.mxu0 0
    %265 = vmatprep.subr.bf16.mxu0 0
    %266 = vmatpush1.bf16.msra.mxu0 0
    %267 = vmatprep.subr.bf16.mxu0 0
    %268 = vmatpush1.bf16.msra.mxu0 0
    %269 = vmatprep.subr.bf16.mxu0 0
    %270 = vmatpush1.bf16.msra.mxu0 0
    %271 = vmatprep.subr.bf16.mxu0 0
    %272 = vmatpush1.bf16.msra.mxu0 0
    %273 = vmatprep.subr.bf16.mxu0 0
    %274 = vmatpush1.bf16.msra.mxu0 0
    %275 = vmatprep.subr.bf16.mxu0 0
    %276 = vmatpush1.bf16.msra.mxu0 0
    %277 = vmatprep.subr.bf16.mxu0 0
    %278 = vmatpush1.bf16.msra.mxu0 0
    %279 = vmatprep.subr.bf16.mxu0 0
    %280 = vmatpush1.bf16.msra.mxu0 0
    %281 = vmatprep.subr.bf16.mxu0 0
    %282 = vmatpush1.bf16.msra.mxu0 0
    %283 = vmatprep.subr.bf16.mxu0 0
    %284 = vmatpush1.bf16.msra.mxu0 0
    %285 = vmatprep.mubr.bf16.mxu0 0
    %286 = vmatmul.mubr.bf16.gmra.mrb[0].mxu0 %v251
    %v287 = vpop.f32.mrb[0].mxu0
    %v288 = vadd.f32 %v223, %v287
    %v289 = vpop.f32.mrb[0].mxu0
    %v290 = vadd.f32 %v227, %v289
    %v291 = vpop.f32.mrb[0].mxu0
    %v292 = vpop.f32.mrb[0].mxu0
    %293 = vdwg.mxu0
    %294 = vst [vmem:[%s7] sm:$0xff] %v288
    %v295 = vtanh.pop %v290
    %v296 = vmul.f32 %v295, 11.0
    %v297 = vadd.f32 %v296, -9.0
    %298 = vst [vmem:[%s7 + $0x8] sm:$0xff] %v297
    // Predicated region
    $region46: #{actor_apply.1} parent=1 // pred_check
      _
    $region47: #{actor_apply.1} parent=1 // pred_check_branch
      %300 = sbr.rel (0) target = $region49
    $region48: #{actor_apply.1} parent=1 // pred_region
      _
    $region49: #{actor_apply.1} parent=1 // pred_fallthru
      _
    // Predicated region
    $region50: #{actor_apply.1} parent=1 // pred_check
      _
    $region51: #{actor_apply.1} parent=1 // pred_check_branch
      %302 = sbr.rel (0) target = $region53
    $region52: #{actor_apply.1} parent=1 // pred_region
      _
    $region53: #{actor_apply.1} parent=1 // pred_fallthru
      _
    %303 = vsyncpa [#allocation3], 1
    %304 = vsyncpa [#allocation5], 1
    %305 = vsyncpa [#allocation8], 1

</llo_original>
